<compile_context>
chip_gen: v7x
topology: tpu7x:2x2x1
jax: 0.10.0
libtpu: 0.0.40
codegen_flags: <defaults>
</compile_context>

<pallas_src>
import jax
import jax.numpy as jnp
from jax.experimental import pallas as pl
from jax.experimental.pallas import tpu as pltpu

INPUT_DIM = 6
HIDDEN_DIM = 64
OUT_DIM = 2
LANE = 128      # lane-dense padded output width
OUT_SUB = 8     # sublane-padded output rows per graph


def _graphsage_kernel(x_ref, a_ref, w1_ref, b1_ref, w2_ref, b2_ref,
                      wlin_ref, blin_ref, o_ref):
    x = x_ref[...]            # (n_g, F)   this graph's node features
    a = a_ref[...]            # (n_g, n_g) row-normalized adjacency (mean aggregation)

    # --- SAGEConv 1 (fused): relu( [A@x , x] @ [Wl1; Wr1] + b1 ) ---
    agg1 = jnp.dot(a, x, preferred_element_type=jnp.float32)
    h1 = jnp.dot(jnp.concatenate([agg1, x], axis=-1), w1_ref[...],
                 preferred_element_type=jnp.float32) + b1_ref[...]
    h1 = jnp.maximum(h1, 0.0)

    # --- SAGEConv 2 (fused): relu( [A@h1 , h1] @ [Wl2; Wr2] + b2 ),  K = 2*H = 128 ---
    agg2 = jnp.dot(a, h1, preferred_element_type=jnp.float32)
    h2 = jnp.dot(jnp.concatenate([agg2, h1], axis=-1), w2_ref[...],
                 preferred_element_type=jnp.float32) + b2_ref[...]
    h2 = jnp.maximum(h2, 0.0)

    # --- global_mean_pool (sublane reduction) + final Linear (lane-padded) ---
    g_pool = jnp.mean(h2, axis=0, keepdims=True)                              # (1, H)
    out_row = (jnp.dot(g_pool, wlin_ref[...], preferred_element_type=jnp.float32)
               + blin_ref[...])                                               # (1, LANE)
    o_ref[...] = jnp.broadcast_to(out_row, (OUT_SUB, LANE))


def jet_graphsage_forward(x, edge_index, batch, params, num_graphs):
    """Plain-JAX glue: per-graph densification + fused/padded weights, then one gridded
    pallas_call over graphs."""
    n = x.shape[0]
    npg = n // num_graphs   # nodes per graph (equal-sized, contiguously numbered)
    # TODO(synk): ragged / non-contiguous graph batches would need scalar-prefetch
    # (PrefetchScalarGridSpec) per-graph node offsets + counts; here graphs are
    # equal-sized and contiguously numbered, matching the batching used below.

    src, dst = edge_index[0], edge_index[1]
    g_edge = batch[dst]                                     # graph id of each edge
    adj = jnp.zeros((num_graphs, npg, npg), jnp.float32)
    adj = adj.at[g_edge, dst - g_edge * npg, src - g_edge * npg].add(1.0)
    a_mean = adj / jnp.maximum(adj.sum(axis=-1, keepdims=True), 1.0)   # (G, n_g, n_g)

    # Fused / padded weights (built once per call in plain JAX).
    w1 = jnp.concatenate([params["wl1"], params["wr1"]], axis=0)       # (2F, H)
    w2 = jnp.concatenate([params["wl2"], params["wr2"]], axis=0)       # (2H, H)
    b1 = params["bl1"]
    b2 = params["bl2"]
    wlin = jnp.zeros((HIDDEN_DIM, LANE), jnp.float32).at[:, :OUT_DIM].set(params["wlin"])
    blin = jnp.zeros((1, LANE), jnp.float32).at[:, :OUT_DIM].set(params["blin"])

    flops_per_graph = (2 * npg * npg * INPUT_DIM
                       + 2 * npg * (2 * INPUT_DIM) * HIDDEN_DIM
                       + 2 * npg * npg * HIDDEN_DIM
                       + 2 * npg * (2 * HIDDEN_DIM) * HIDDEN_DIM
                       + 2 * HIDDEN_DIM * LANE)
    bytes_accessed = 4 * (x.size + a_mean.size + w1.size + b1.size + w2.size + b2.size
                          + wlin.size + blin.size + num_graphs * OUT_SUB * LANE)

    out_padded = pl.pallas_call(
        _graphsage_kernel,
        out_shape=jax.ShapeDtypeStruct((num_graphs, OUT_SUB, LANE), jnp.float32),
        grid=(num_graphs,),
        in_specs=[
            pl.BlockSpec((npg, INPUT_DIM), lambda g: (g, 0)),             # x: per-graph rows
            pl.BlockSpec((None, npg, npg), lambda g: (g, 0, 0)),          # A: per-graph block
            pl.BlockSpec((2 * INPUT_DIM, HIDDEN_DIM), lambda g: (0, 0)),  # W1 (VMEM-resident)
            pl.BlockSpec((1, HIDDEN_DIM), lambda g: (0, 0)),              # b1
            pl.BlockSpec((2 * HIDDEN_DIM, HIDDEN_DIM), lambda g: (0, 0)), # W2
            pl.BlockSpec((1, HIDDEN_DIM), lambda g: (0, 0)),              # b2
            pl.BlockSpec((HIDDEN_DIM, LANE), lambda g: (0, 0)),           # Wlin (lane-padded)
            pl.BlockSpec((1, LANE), lambda g: (0, 0)),                    # blin (lane-padded)
        ],
        out_specs=pl.BlockSpec((None, OUT_SUB, LANE), lambda g: (g, 0, 0)),
        compiler_params=pltpu.CompilerParams(
            dimension_semantics=("parallel",)),
        cost_estimate=pl.CostEstimate(
            flops=int(num_graphs * flops_per_graph),
            transcendentals=0,
            bytes_accessed=int(bytes_accessed)),
    )(x, a_mean, w1, b1, w2, b2, wlin, blin)

    return out_padded[:, 0, :OUT_DIM]                                     # (G, 2)


def init_params(key):
    ks = jax.random.split(key, 7)

    def uni(k, shape, fan_in):
        bound = 1.0 / jnp.sqrt(fan_in)
        return jax.random.uniform(k, shape, jnp.float32, -bound, bound)

    # Weights stored as (in_dim, out_dim) so the kernel uses x @ W.
    return {
        "wl1": uni(ks[0], (INPUT_DIM, HIDDEN_DIM), INPUT_DIM),
        "bl1": uni(ks[1], (1, HIDDEN_DIM), INPUT_DIM),
        "wr1": uni(ks[2], (INPUT_DIM, HIDDEN_DIM), INPUT_DIM),   # root weight, no bias
        "wl2": uni(ks[3], (HIDDEN_DIM, HIDDEN_DIM), HIDDEN_DIM),
        "bl2": uni(ks[4], (1, HIDDEN_DIM), HIDDEN_DIM),
        "wr2": uni(ks[5], (HIDDEN_DIM, HIDDEN_DIM), HIDDEN_DIM),
        "wlin": uni(ks[6], (HIDDEN_DIM, OUT_DIM), HIDDEN_DIM),
        "blin": jnp.zeros((1, OUT_DIM), jnp.float32),
    }


def _reference(x, edge_index, batch, params, num_graphs):
    """Pure-JAX whole-batch reference of the same math for a correctness check."""
    n = x.shape[0]
    src, dst = edge_index[0], edge_index[1]
    adj = jnp.zeros((n, n), jnp.float32).at[dst, src].add(1.0)
    a = adj / jnp.maximum(adj.sum(1, keepdims=True), 1.0)
    onehot = (batch[None, :] == jnp.arange(num_graphs)[:, None]).astype(jnp.float32)
    p = onehot / jnp.maximum(onehot.sum(1, keepdims=True), 1.0)

    h1 = jnp.maximum((a @ x) @ params["wl1"] + params["bl1"] + x @ params["wr1"], 0.0)
    h2 = jnp.maximum((a @ h1) @ params["wl2"] + params["bl2"] + h1 @ params["wr2"], 0.0)
    return (p @ h2) @ params["wlin"] + params["blin"]


if __name__ == "__main__":
    key = jax.random.PRNGKey(0)
    k_x, k_e0, k_e1, k_p = jax.random.split(key, 4)

    # Small graph batch: 2 jets ("graphs"), 16 nodes each, 64 directed edges per jet.
    nodes_per_graph = 16
    num_graphs = 2
    n = nodes_per_graph * num_graphs
    edges_per_graph = 64

    x = jax.random.normal(k_x, (n, INPUT_DIM), jnp.float32)

    e0 = jax.random.randint(k_e0, (2, edges_per_graph), 0, nodes_per_graph)
    e1 = jax.random.randint(k_e1, (2, edges_per_graph), 0, nodes_per_graph) + nodes_per_graph
    edge_index = jnp.concatenate([e0, e1], axis=1).astype(jnp.int32)   # (2, 128)

    batch = jnp.concatenate([jnp.zeros(nodes_per_graph, jnp.int32),
                             jnp.ones(nodes_per_graph, jnp.int32)])

    params = init_params(k_p)

    out = jet_graphsage_forward(x, edge_index, batch, params, num_graphs)
    out = jax.block_until_ready(out)

    ref = _reference(x, edge_index, batch, params, num_graphs)
    assert out.shape == (num_graphs, OUT_DIM)
    assert jnp.allclose(out, ref, atol=1e-4, rtol=1e-4), (out, ref)

    print("KERNEL_OK")
</pallas_src>

<mosaic_0001>
module attributes {stable_mosaic.version = 11 : i64} {
  func.func @_graphsage_kernel(%arg0: i32, %arg1: memref<16x6xf32, #tpu.memory_space<vmem>>, %arg2: memref<1x16x16xf32, #tpu.memory_space<vmem>>, %arg3: memref<12x64xf32, #tpu.memory_space<vmem>>, %arg4: memref<1x64xf32, #tpu.memory_space<vmem>>, %arg5: memref<128x64xf32, #tpu.memory_space<vmem>>, %arg6: memref<1x64xf32, #tpu.memory_space<vmem>>, %arg7: memref<64x128xf32, #tpu.memory_space<vmem>>, %arg8: memref<1x128xf32, #tpu.memory_space<vmem>>, %arg9: memref<1x8x128xf32, #tpu.memory_space<vmem>>) attributes {dimension_semantics = [#tpu.dimension_semantics<parallel>], iteration_bounds = array<i64: 2>, scalar_prefetch = 0 : i64, scratch_operands = 0 : i64, tpu.core_type = #tpu.core_type<tc>, window_params = [{transform_indices = @transform_0, window_bounds = array<i64: 16, 6>}, {transform_indices = @transform_1, window_bounds = array<i64: 1, 16, 16>}, {pipeline_mode = #tpu.pipeline_mode<synchronous>, transform_indices = @transform_2, window_bounds = array<i64: 12, 64>}, {pipeline_mode = #tpu.pipeline_mode<synchronous>, transform_indices = @transform_3, window_bounds = array<i64: 1, 64>}, {pipeline_mode = #tpu.pipeline_mode<synchronous>, transform_indices = @transform_4, window_bounds = array<i64: 128, 64>}, {pipeline_mode = #tpu.pipeline_mode<synchronous>, transform_indices = @transform_5, window_bounds = array<i64: 1, 64>}, {pipeline_mode = #tpu.pipeline_mode<synchronous>, transform_indices = @transform_6, window_bounds = array<i64: 64, 128>}, {pipeline_mode = #tpu.pipeline_mode<synchronous>, transform_indices = @transform_7, window_bounds = array<i64: 1, 128>}, {transform_indices = @transform_8, window_bounds = array<i64: 1, 8, 128>}]} {
    %c0 = arith.constant 0 : index
    %c0_0 = arith.constant 0 : index
    %0 = vector.load %arg1[%c0, %c0_0] : memref<16x6xf32, #tpu.memory_space<vmem>>, vector<16x6xf32>
    %c0_1 = arith.constant 0 : index
    %c0_2 = arith.constant 0 : index
    %c0_3 = arith.constant 0 : index
    %1 = vector.load %arg2[%c0_1, %c0_2, %c0_3] : memref<1x16x16xf32, #tpu.memory_space<vmem>>, vector<1x16x16xf32>
    %2 = vector.shape_cast %1 : vector<1x16x16xf32> to vector<16x16xf32>
    %cst = arith.constant dense<0.000000e+00> : vector<16x6xf32>
    %3 = tpu.matmul %2, %0, %cst {dimension_numbers = #tpu.dot_dimension_numbers<[1], [0], [0], [1], [0, 0, 1, 1], [], []>} : vector<16x16xf32>, vector<16x6xf32>, vector<16x6xf32> -> vector<16x6xf32>
    %4 = tpu.concatenate %3, %0 in 1 : vector<16x6xf32>, vector<16x6xf32> -> vector<16x12xf32>
    %c0_4 = arith.constant 0 : index
    %c0_5 = arith.constant 0 : index
    %5 = vector.load %arg3[%c0_4, %c0_5] : memref<12x64xf32, #tpu.memory_space<vmem>>, vector<12x64xf32>
    %cst_6 = arith.constant dense<0.000000e+00> : vector<16x64xf32>
    %6 = tpu.matmul %4, %5, %cst_6 {dimension_numbers = #tpu.dot_dimension_numbers<[1], [0], [0], [1], [0, 0, 1, 1], [], []>} : vector<16x12xf32>, vector<12x64xf32>, vector<16x64xf32> -> vector<16x64xf32>
    %c0_7 = arith.constant 0 : index
    %c0_8 = arith.constant 0 : index
    %7 = vector.load %arg4[%c0_7, %c0_8] : memref<1x64xf32, #tpu.memory_space<vmem>>, vector<1x64xf32>
    %8 = vector.broadcast %7 : vector<1x64xf32> to vector<16x64xf32>
    %9 = arith.addf %6, %8 : vector<16x64xf32>
    %cst_9 = arith.constant 0.000000e+00 : f32
    %10 = vector.broadcast %cst_9 : f32 to vector<16x64xf32>
    %11 = arith.maximumf %9, %10 : vector<16x64xf32>
    %cst_10 = arith.constant dense<0.000000e+00> : vector<16x64xf32>
    %12 = tpu.matmul %2, %11, %cst_10 {dimension_numbers = #tpu.dot_dimension_numbers<[1], [0], [0], [1], [0, 0, 1, 1], [], []>} : vector<16x16xf32>, vector<16x64xf32>, vector<16x64xf32> -> vector<16x64xf32>
    %13 = tpu.concatenate %12, %11 in 1 : vector<16x64xf32>, vector<16x64xf32> -> vector<16x128xf32>
    %c0_11 = arith.constant 0 : index
    %c0_12 = arith.constant 0 : index
    %14 = vector.load %arg5[%c0_11, %c0_12] : memref<128x64xf32, #tpu.memory_space<vmem>>, vector<128x64xf32>
    %cst_13 = arith.constant dense<0.000000e+00> : vector<16x64xf32>
    %15 = tpu.matmul %13, %14, %cst_13 {dimension_numbers = #tpu.dot_dimension_numbers<[1], [0], [0], [1], [0, 0, 1, 1], [], []>} : vector<16x128xf32>, vector<128x64xf32>, vector<16x64xf32> -> vector<16x64xf32>
    %c0_14 = arith.constant 0 : index
    %c0_15 = arith.constant 0 : index
    %16 = vector.load %arg6[%c0_14, %c0_15] : memref<1x64xf32, #tpu.memory_space<vmem>>, vector<1x64xf32>
    %17 = vector.broadcast %16 : vector<1x64xf32> to vector<16x64xf32>
    %18 = arith.addf %15, %17 : vector<16x64xf32>
    %cst_16 = arith.constant 0.000000e+00 : f32
    %19 = vector.broadcast %cst_16 : f32 to vector<16x64xf32>
    %20 = arith.maximumf %18, %19 : vector<16x64xf32>
    %cst_17 = arith.constant dense<0.000000e+00> : vector<64xf32>
    %21 = vector.multi_reduction <add>, %20, %cst_17 [0] : vector<16x64xf32> to vector<64xf32>
    %22 = vector.shape_cast %21 : vector<64xf32> to vector<1x64xf32>
    %cst_18 = arith.constant 1.600000e+01 : f32
    %23 = vector.broadcast %cst_18 : f32 to vector<1x64xf32>
    %24 = arith.divf %22, %23 : vector<1x64xf32>
    %c0_19 = arith.constant 0 : index
    %c0_20 = arith.constant 0 : index
    %25 = vector.load %arg7[%c0_19, %c0_20] : memref<64x128xf32, #tpu.memory_space<vmem>>, vector<64x128xf32>
    %cst_21 = arith.constant dense<0.000000e+00> : vector<1x128xf32>
    %26 = tpu.matmul %24, %25, %cst_21 {dimension_numbers = #tpu.dot_dimension_numbers<[1], [0], [0], [1], [0, 0, 1, 1], [], []>} : vector<1x64xf32>, vector<64x128xf32>, vector<1x128xf32> -> vector<1x128xf32>
    %c0_22 = arith.constant 0 : index
    %c0_23 = arith.constant 0 : index
    %27 = vector.load %arg8[%c0_22, %c0_23] : memref<1x128xf32, #tpu.memory_space<vmem>>, vector<1x128xf32>
    %28 = arith.addf %26, %27 : vector<1x128xf32>
    %29 = vector.shape_cast %28 : vector<1x128xf32> to vector<1x128xf32>
    %30 = vector.broadcast %29 : vector<1x128xf32> to vector<8x128xf32>
    %c0_24 = arith.constant 0 : index
    %c0_25 = arith.constant 0 : index
    %c0_26 = arith.constant 0 : index
    %31 = vector.load %arg9[%c0_24, %c0_25, %c0_26] : memref<1x8x128xf32, #tpu.memory_space<vmem>>, vector<1x8x128xf32>
    %32 = vector.shape_cast %31 : vector<1x8x128xf32> to vector<8x128xf32>
    %33 = vector.shape_cast %30 : vector<8x128xf32> to vector<1x8x128xf32>
    tpu.vector_store %arg9[%c0_24, %c0_25, %c0_26], %33 {strides = array<i32>} : memref<1x8x128xf32, #tpu.memory_space<vmem>>, vector<1x8x128xf32>,
    return
  }
  func.func @transform_0(%arg0: i32) -> (i32, i32) {
    %c0_i32 = arith.constant 0 : i32
    %c0_i32_0 = arith.constant 0 : i32
    return %arg0, %c0_i32 : i32, i32
  }
  func.func @transform_1(%arg0: i32) -> (i32, i32, i32) {
    %c0_i32 = arith.constant 0 : i32
    %c0_i32_0 = arith.constant 0 : i32
    %c0_i32_1 = arith.constant 0 : i32
    return %arg0, %c0_i32, %c0_i32_0 : i32, i32, i32
  }
  func.func @transform_2(%arg0: i32) -> (i32, i32) {
    %c0_i32 = arith.constant 0 : i32
    %c0_i32_0 = arith.constant 0 : i32
    %c0_i32_1 = arith.constant 0 : i32
    return %c0_i32, %c0_i32_0 : i32, i32
  }
  func.func @transform_3(%arg0: i32) -> (i32, i32) {
    %c0_i32 = arith.constant 0 : i32
    %c0_i32_0 = arith.constant 0 : i32
    %c0_i32_1 = arith.constant 0 : i32
    return %c0_i32, %c0_i32_0 : i32, i32
  }
  func.func @transform_4(%arg0: i32) -> (i32, i32) {
    %c0_i32 = arith.constant 0 : i32
    %c0_i32_0 = arith.constant 0 : i32
    %c0_i32_1 = arith.constant 0 : i32
    return %c0_i32, %c0_i32_0 : i32, i32
  }
  func.func @transform_5(%arg0: i32) -> (i32, i32) {
    %c0_i32 = arith.constant 0 : i32
    %c0_i32_0 = arith.constant 0 : i32
    %c0_i32_1 = arith.constant 0 : i32
    return %c0_i32, %c0_i32_0 : i32, i32
  }
  func.func @transform_6(%arg0: i32) -> (i32, i32) {
    %c0_i32 = arith.constant 0 : i32
    %c0_i32_0 = arith.constant 0 : i32
    %c0_i32_1 = arith.constant 0 : i32
    return %c0_i32, %c0_i32_0 : i32, i32
  }
  func.func @transform_7(%arg0: i32) -> (i32, i32) {
    %c0_i32 = arith.constant 0 : i32
    %c0_i32_0 = arith.constant 0 : i32
    %c0_i32_1 = arith.constant 0 : i32
    return %c0_i32, %c0_i32_0 : i32, i32
  }
  func.func @transform_8(%arg0: i32) -> (i32, i32, i32) {
    %c0_i32 = arith.constant 0 : i32
    %c0_i32_0 = arith.constant 0 : i32
    %c0_i32_1 = arith.constant 0 : i32
    return %arg0, %c0_i32, %c0_i32_0 : i32, i32, i32
  }
}

</mosaic_0001>

<llo_original>
// kernel: tpu_custom_call.1
$region0: #{tpu_custom_call.1}
  #allocation0 [shape = 'u32[]', space=smem, size = 0x4, offset = 0x4, fixed_abs, tag = 'smem constant byte address 0x4 - core index']
  #allocation1 [shape = 'u32[144,128]{1,0:T(1,128)}', space=vmem, size = 0x12000, scoped, tag = 'internal scratch']
  %s0 = inlined_call_operand.vmem [shape: f32[32,6], index: 0, kind: input, shape index: {}]
  %s1 = inlined_call_operand.vmem [shape: f32[2,16,16], index: 1, kind: input, shape index: {}]
  %s2 = inlined_call_operand.vmem [shape: f32[12,64], index: 2, kind: input, shape index: {}]
  %s3 = inlined_call_operand.vmem [shape: f32[1,64], index: 3, kind: input, shape index: {}]
  %s4 = inlined_call_operand.vmem [shape: f32[128,64], index: 4, kind: input, shape index: {}]
  %s5 = inlined_call_operand.vmem [shape: f32[1,64], index: 5, kind: input, shape index: {}]
  %s6 = inlined_call_operand.vmem [shape: f32[64,128], index: 6, kind: input, shape index: {}]
  %s7 = inlined_call_operand.vmem [shape: f32[1,128], index: 7, kind: input, shape index: {}]
  %s8 = inlined_call_operand.hbm [shape: f32[2,8,128], index: 8, kind: output, shape index: {}]
  %s9 = sld [smem:[#allocation0]]
  $region65: #{tpu_custom_call.1} parent=0
    _
  %s11 = ssub.s32 1, %s9
  %s12 = scalar_select 0, %s11, %s9
  $region1: #{tpu_custom_call.1} parent=0
    #allocation2 [shape = 'u8[8192]{0}', space=vmem, size = 0x2000, scoped, tag = 'output window, operand 0']
    #allocation3 [shape = 's32[2]{0}', space=sflag, size = 0x8, scoped, tag = 'scoped memory for tpu_custom_call.1']
    %13 = vsyncpa [#allocation3], 0
    %s14 = scalar_lea.sflag [#allocation3], 1
    %15 = vsyncpa %s14, 0
    loop: start=0, step=1, limit=4
    $region2: #{tpu_custom_call.1} parent=1 // loop_pre_header
      _
    $region3: #{tpu_custom_call.1} parent=1 // loop_header
      %s17 = sphi 0, %s21
      %p18 = scmp.ge.s32.totalorder %s17, 4
      %s27 = sphi 0, %s29
      %s30 = sphi 0, %s27
      %s31 = sphi 0, %s30
      %s47 = sphi 0, %s31
      %s53 = sphi 0, %s55
      %s56 = sphi 0, %s53
      %s57 = sphi 0, %s56
      %s73 = sphi 0, %s57
      %s77 = sphi 0, %s77
      %s79 = sphi 0, %s77
      %s80 = sphi 0, %s79
      %s94 = sphi 0, %s80
      %s98 = sphi 0, %s98
      %s100 = sphi 0, %s98
      %s101 = sphi 0, %s100
      %s115 = sphi 0, %s101
      %s119 = sphi 0, %s119
      %s121 = sphi 0, %s119
      %s122 = sphi 0, %s121
      %s136 = sphi 0, %s122
      %s140 = sphi 0, %s140
      %s142 = sphi 0, %s140
      %s143 = sphi 0, %s142
      %s157 = sphi 0, %s143
      %s161 = sphi 0, %s161
      %s163 = sphi 0, %s161
      %s164 = sphi 0, %s163
      %s178 = sphi 0, %s164
      %s182 = sphi 0, %s182
      %s184 = sphi 0, %s182
      %s185 = sphi 0, %s184
      %s199 = sphi 0, %s185
      %s205 = sphi 0, %s207
      %s208 = sphi 0, %s205
      %s209 = sphi 0, %s208
      %s225 = sphi 0, %s209
    $region4: #{tpu_custom_call.1} parent=1 // loop_header_branch
      %20 = sbr.rel (%p18) target = $region8
    $region5: #{tpu_custom_call.1} parent=1 // loop_body
      %s22 = ssub.s32 %s17, 1
      %s23 = ssub.s32 %s17, 2
      %s24 = sadd.s32 %s17, 1
      %s25 = ssub.s32 %s17, %s24
      %p26 = scmp.eq.s32.totalorder %s25, 0
      %s28 = sadd.s32 %s27, 1
      %s29 = scalar_select %p26, %s27, %s28
      %p32 = pneg %p26
      %p33 = scmp.eq.s32.totalorder %s17, 1
      %p34 = por %p32, %p33
      %p35 = scmp.ne.s32.totalorder %s27, %s30
      %p36 = scmp.eq.s32.totalorder %s17, 0
      %p37 = por %p35, %p36
      %p38 = scmp.ne.s32.totalorder %s27, %s30
      %p39 = scmp.eq.s32.totalorder %s22, 1
      %p40 = por %p38, %p39
      %p41 = scmp.ne.s32.totalorder %s30, %s31
      %p42 = scmp.eq.s32.totalorder %s22, 0
      %p43 = por %p41, %p42
      %p44 = scmp.ne.s32.totalorder %s30, %s31
      %p45 = scmp.eq.s32.totalorder %s23, 1
      %p46 = por %p44, %p45
      %p48 = scmp.ne.s32.totalorder %s31, %s47
      %p49 = scmp.eq.s32.totalorder %s23, 0
      %p50 = por %p48, %p49
      %s51 = ssub.s32 %s17, %s24
      %p52 = scmp.eq.s32.totalorder %s51, 0
      %s54 = sadd.s32 %s53, 1
      %s55 = scalar_select %p52, %s53, %s54
      %p58 = pneg %p52
      %p59 = scmp.eq.s32.totalorder %s17, 1
      %p60 = por %p58, %p59
      %p61 = scmp.ne.s32.totalorder %s53, %s56
      %p62 = scmp.eq.s32.totalorder %s17, 0
      %p63 = por %p61, %p62
      %p64 = scmp.ne.s32.totalorder %s53, %s56
      %p65 = scmp.eq.s32.totalorder %s22, 1
      %p66 = por %p64, %p65
      %p67 = scmp.ne.s32.totalorder %s56, %s57
      %p68 = scmp.eq.s32.totalorder %s22, 0
      %p69 = por %p67, %p68
      %p70 = scmp.ne.s32.totalorder %s56, %s57
      %p71 = scmp.eq.s32.totalorder %s23, 1
      %p72 = por %p70, %p71
      %p74 = scmp.ne.s32.totalorder %s57, %s73
      %p75 = scmp.eq.s32.totalorder %s23, 0
      %p76 = por %p74, %p75
      %s78 = sadd.s32 %s77, 1
      %p81 = scmp.eq.s32.totalorder %s17, 1
      %p82 = scmp.ne.s32.totalorder %s77, %s79
      %p83 = scmp.eq.s32.totalorder %s17, 0
      %p84 = por %p82, %p83
      %p85 = scmp.ne.s32.totalorder %s77, %s79
      %p86 = scmp.eq.s32.totalorder %s22, 1
      %p87 = por %p85, %p86
      %p88 = scmp.ne.s32.totalorder %s79, %s80
      %p89 = scmp.eq.s32.totalorder %s22, 0
      %p90 = por %p88, %p89
      %p91 = scmp.ne.s32.totalorder %s79, %s80
      %p92 = scmp.eq.s32.totalorder %s23, 1
      %p93 = por %p91, %p92
      %p95 = scmp.ne.s32.totalorder %s80, %s94
      %p96 = scmp.eq.s32.totalorder %s23, 0
      %p97 = por %p95, %p96
      %s99 = sadd.s32 %s98, 1
      %p102 = scmp.eq.s32.totalorder %s17, 1
      %p103 = scmp.ne.s32.totalorder %s98, %s100
      %p104 = scmp.eq.s32.totalorder %s17, 0
      %p105 = por %p103, %p104
      %p106 = scmp.ne.s32.totalorder %s98, %s100
      %p107 = scmp.eq.s32.totalorder %s22, 1
      %p108 = por %p106, %p107
      %p109 = scmp.ne.s32.totalorder %s100, %s101
      %p110 = scmp.eq.s32.totalorder %s22, 0
      %p111 = por %p109, %p110
      %p112 = scmp.ne.s32.totalorder %s100, %s101
      %p113 = scmp.eq.s32.totalorder %s23, 1
      %p114 = por %p112, %p113
      %p116 = scmp.ne.s32.totalorder %s101, %s115
      %p117 = scmp.eq.s32.totalorder %s23, 0
      %p118 = por %p116, %p117
      %s120 = sadd.s32 %s119, 1
      %p123 = scmp.eq.s32.totalorder %s17, 1
      %p124 = scmp.ne.s32.totalorder %s119, %s121
      %p125 = scmp.eq.s32.totalorder %s17, 0
      %p126 = por %p124, %p125
      %p127 = scmp.ne.s32.totalorder %s119, %s121
      %p128 = scmp.eq.s32.totalorder %s22, 1
      %p129 = por %p127, %p128
      %p130 = scmp.ne.s32.totalorder %s121, %s122
      %p131 = scmp.eq.s32.totalorder %s22, 0
      %p132 = por %p130, %p131
      %p133 = scmp.ne.s32.totalorder %s121, %s122
      %p134 = scmp.eq.s32.totalorder %s23, 1
      %p135 = por %p133, %p134
      %p137 = scmp.ne.s32.totalorder %s122, %s136
      %p138 = scmp.eq.s32.totalorder %s23, 0
      %p139 = por %p137, %p138
      %s141 = sadd.s32 %s140, 1
      %p144 = scmp.eq.s32.totalorder %s17, 1
      %p145 = scmp.ne.s32.totalorder %s140, %s142
      %p146 = scmp.eq.s32.totalorder %s17, 0
      %p147 = por %p145, %p146
      %p148 = scmp.ne.s32.totalorder %s140, %s142
      %p149 = scmp.eq.s32.totalorder %s22, 1
      %p150 = por %p148, %p149
      %p151 = scmp.ne.s32.totalorder %s142, %s143
      %p152 = scmp.eq.s32.totalorder %s22, 0
      %p153 = por %p151, %p152
      %p154 = scmp.ne.s32.totalorder %s142, %s143
      %p155 = scmp.eq.s32.totalorder %s23, 1
      %p156 = por %p154, %p155
      %p158 = scmp.ne.s32.totalorder %s143, %s157
      %p159 = scmp.eq.s32.totalorder %s23, 0
      %p160 = por %p158, %p159
      %s162 = sadd.s32 %s161, 1
      %p165 = scmp.eq.s32.totalorder %s17, 1
      %p166 = scmp.ne.s32.totalorder %s161, %s163
      %p167 = scmp.eq.s32.totalorder %s17, 0
      %p168 = por %p166, %p167
      %p169 = scmp.ne.s32.totalorder %s161, %s163
      %p170 = scmp.eq.s32.totalorder %s22, 1
      %p171 = por %p169, %p170
      %p172 = scmp.ne.s32.totalorder %s163, %s164
      %p173 = scmp.eq.s32.totalorder %s22, 0
      %p174 = por %p172, %p173
      %p175 = scmp.ne.s32.totalorder %s163, %s164
      %p176 = scmp.eq.s32.totalorder %s23, 1
      %p177 = por %p175, %p176
      %p179 = scmp.ne.s32.totalorder %s164, %s178
      %p180 = scmp.eq.s32.totalorder %s23, 0
      %p181 = por %p179, %p180
      %s183 = sadd.s32 %s182, 1
      %p186 = scmp.eq.s32.totalorder %s17, 1
      %p187 = scmp.ne.s32.totalorder %s182, %s184
      %p188 = scmp.eq.s32.totalorder %s17, 0
      %p189 = por %p187, %p188
      %p190 = scmp.ne.s32.totalorder %s182, %s184
      %p191 = scmp.eq.s32.totalorder %s22, 1
      %p192 = por %p190, %p191
      %p193 = scmp.ne.s32.totalorder %s184, %s185
      %p194 = scmp.eq.s32.totalorder %s22, 0
      %p195 = por %p193, %p194
      %p196 = scmp.ne.s32.totalorder %s184, %s185
      %p197 = scmp.eq.s32.totalorder %s23, 1
      %p198 = por %p196, %p197
      %p200 = scmp.ne.s32.totalorder %s185, %s199
      %p201 = scmp.eq.s32.totalorder %s23, 0
      %p202 = por %p200, %p201
      %s203 = ssub.s32 %s17, %s24
      %p204 = scmp.eq.s32.totalorder %s203, 0
      %s206 = sadd.s32 %s205, 1
      %s207 = scalar_select %p204, %s205, %s206
      %p210 = pneg %p204
      %p211 = scmp.eq.s32.totalorder %s17, 1
      %p212 = por %p210, %p211
      %p213 = scmp.ne.s32.totalorder %s205, %s208
      %p214 = scmp.eq.s32.totalorder %s17, 0
      %p215 = por %p213, %p214
      %p216 = scmp.ne.s32.totalorder %s205, %s208
      %p217 = scmp.eq.s32.totalorder %s22, 1
      %p218 = por %p216, %p217
      %p219 = scmp.ne.s32.totalorder %s208, %s209
      %p220 = scmp.eq.s32.totalorder %s22, 0
      %p221 = por %p219, %p220
      %p222 = scmp.ne.s32.totalorder %s208, %s209
      %p223 = scmp.eq.s32.totalorder %s23, 1
      %p224 = por %p222, %p223
      %p226 = scmp.ne.s32.totalorder %s209, %s225
      %p227 = scmp.eq.s32.totalorder %s23, 0
      %p228 = por %p226, %p227
      %p229 = scmp.le.s32.totalorder 1, %s17
      %p230 = scmp.lt.s32.totalorder %s17, 3
      %p231 = pnand %p229, %p230
      %p232 = pneg %p231
      // Predicated region
      $region9: #{tpu_custom_call.1} parent=5 // pred_check
        _
      $region10: #{tpu_custom_call.1} parent=5 // pred_check_branch
        %234 = sbr.rel (%p231) target = $region12
      $region11: #{tpu_custom_call.1} parent=5 // pred_region
        %s235 = ssub.s32 %s17, 1
        // Predicated region
        $region13: #{tpu_custom_call.1} parent=11 // pred_check
          %p236 = pneg %p90
        $region14: #{tpu_custom_call.1} parent=11 // pred_check_branch
          %238 = sbr.rel (%p236) target = $region16
        $region15: #{tpu_custom_call.1} parent=11 // pred_region
          _
        $region16: #{tpu_custom_call.1} parent=11 // pred_fallthru
          _
        // Predicated region
        $region17: #{tpu_custom_call.1} parent=11 // pred_check
          %p239 = pneg %p111
        $region18: #{tpu_custom_call.1} parent=11 // pred_check_branch
          %241 = sbr.rel (%p239) target = $region20
        $region19: #{tpu_custom_call.1} parent=11 // pred_region
          _
        $region20: #{tpu_custom_call.1} parent=11 // pred_fallthru
          _
        // Predicated region
        $region21: #{tpu_custom_call.1} parent=11 // pred_check
          %p242 = pneg %p132
        $region22: #{tpu_custom_call.1} parent=11 // pred_check_branch
          %244 = sbr.rel (%p242) target = $region24
        $region23: #{tpu_custom_call.1} parent=11 // pred_region
          _
        $region24: #{tpu_custom_call.1} parent=11 // pred_fallthru
          _
        // Predicated region
        $region25: #{tpu_custom_call.1} parent=11 // pred_check
          %p245 = pneg %p153
        $region26: #{tpu_custom_call.1} parent=11 // pred_check_branch
          %247 = sbr.rel (%p245) target = $region28
        $region27: #{tpu_custom_call.1} parent=11 // pred_region
          _
        $region28: #{tpu_custom_call.1} parent=11 // pred_fallthru
          _
        // Predicated region
        $region29: #{tpu_custom_call.1} parent=11 // pred_check
          %p248 = pneg %p174
        $region30: #{tpu_custom_call.1} parent=11 // pred_check_branch
          %250 = sbr.rel (%p248) target = $region32
        $region31: #{tpu_custom_call.1} parent=11 // pred_region
          _
        $region32: #{tpu_custom_call.1} parent=11 // pred_fallthru
          _
        // Predicated region
        $region33: #{tpu_custom_call.1} parent=11 // pred_check
          %p251 = pneg %p195
        $region34: #{tpu_custom_call.1} parent=11 // pred_check_branch
          %253 = sbr.rel (%p251) target = $region36
        $region35: #{tpu_custom_call.1} parent=11 // pred_region
          _
        $region36: #{tpu_custom_call.1} parent=11 // pred_fallthru
          _
      $region12: #{tpu_custom_call.1} parent=5 // pred_fallthru
        _
      %p254 = scmp.lt.s32.totalorder %s17, 2
      // Predicated region
      $region37: #{tpu_custom_call.1} parent=5 // pred_check
        %p255 = pneg %p254
      $region38: #{tpu_custom_call.1} parent=5 // pred_check_branch
        %257 = sbr.rel (%p255) target = $region40
      $region39: #{tpu_custom_call.1} parent=5 // pred_region
        // Predicated region
        $region41: #{tpu_custom_call.1} parent=39 // pred_check
          %p258 = pneg %p37
        $region42: #{tpu_custom_call.1} parent=39 // pred_check_branch
          %260 = sbr.rel (%p258) target = $region44
        $region43: #{tpu_custom_call.1} parent=39 // pred_region
          %s261 = smul.u32 2, %s17
          %p262 = scmp.lt.s32.totalorder %s261, 3
          %s263 = scalar_select %p262, %s261, 3
          %s264 = smul.addr %s263, 8
          %s265 = scalar_lea.vmem %s0, %s264
          %s266 = smul.u32 2, %s17
        $region44: #{tpu_custom_call.1} parent=39 // pred_fallthru
          _
        // Predicated region
        $region45: #{tpu_custom_call.1} parent=39 // pred_check
          %p267 = pneg %p63
        $region46: #{tpu_custom_call.1} parent=39 // pred_check_branch
          %269 = sbr.rel (%p267) target = $region48
        $region47: #{tpu_custom_call.1} parent=39 // pred_region
          %p270 = scmp.lt.s32.totalorder %s17, 1
          %s271 = scalar_select %p270, %s17, 1
          %s272 = smul.addr %s271, 2
          %s273 = smul.addr %s272, 8
          %s274 = scalar_lea.vmem %s1, %s273
        $region48: #{tpu_custom_call.1} parent=39 // pred_fallthru
          _
      $region40: #{tpu_custom_call.1} parent=5 // pred_fallthru
        _
      %p275 = scmp.le.s32.totalorder 1, %s17
      %p276 = scmp.lt.s32.totalorder %s17, 3
      %p277 = pnand %p275, %p276
      %p278 = pneg %p277
      // Predicated region
      $region49: #{tpu_custom_call.1} parent=5 // pred_check
        _
      $region50: #{tpu_custom_call.1} parent=5 // pred_check_branch
        %280 = sbr.rel (%p277) target = $region52
      $region51: #{tpu_custom_call.1} parent=5 // pred_region
        %s281 = ssub.s32 %s17, 1
        %s282 = smul.u32 2, %s22
        %p283 = scmp.lt.s32.totalorder %s282, 3
        %s284 = scalar_select %p283, %s282, 3
        %s285 = smul.addr %s284, 8
        %s286 = scalar_lea.vmem %s0, %s285
        %p287 = pneg %p43
        %p288 = pneg %p40
        %p289 = scmp.lt.s32.totalorder %s22, 1
        %s290 = scalar_select %p289, %s22, 1
        %s291 = smul.addr %s290, 2
        %s292 = smul.addr %s291, 8
        %s293 = scalar_lea.vmem %s1, %s292
        %p294 = pneg %p69
        %p295 = pneg %p66
        %p296 = pneg %p90
        %p297 = pneg %p87
        %p298 = pneg %p111
        %p299 = pneg %p108
        %p300 = pneg %p132
        %p301 = pneg %p129
        %p302 = pneg %p153
        %p303 = pneg %p150
        %p304 = pneg %p174
        %p305 = pneg %p171
        %p306 = pneg %p195
        %p307 = pneg %p192
        %p308 = pneg %p221
        %p309 = pneg %p218
        %s310 = sand.u32 %s208, 1
        %s311 = scalar_lea.sflag [#allocation3], %s310
        %s312 = sand.u32 %s208, 1
        %s313 = smul.addr %s312, 8
        %s314 = scalar_lea.vmem [#allocation2], %s313
        %s315 = smul.u32 2, %s22
        %p316 = scmp.lt.s32.totalorder %s315, 3
        %s317 = scalar_select %p316, %s315, 3
        %s318 = smul.addr %s317, 8
        %s319 = scalar_lea.vmem %s0, %s318
        %s320 = smul.u32 2, %s22
        %p321 = scmp.lt.s32.totalorder %s22, 1
        %s322 = scalar_select %p321, %s22, 1
        %s323 = smul.addr %s322, 2
        %s324 = smul.addr %s323, 8
        %s325 = scalar_lea.vmem %s1, %s324
        %v326 = vld [vmem:[%s319] sm:$0xff]
        %v327 = vld [vmem:[%s319 + $0x8] sm:$0xff]
        %v328 = vld [vmem:[%s325] sm:$0xff]
        %v329 = vld [vmem:[%s325 + $0x8] sm:$0xff]
        %vm330 = vcmask 130048
        %v332 = vsel %vm330, %v328, 0
        %v335 = vsel %vm330, %v329, 0
        %337 = vmatprep.subr.mxu0 0.0
        %338 = vmatpush1.msra.mxu0 %v326
        %339 = vmatprep.subr.mxu0 0.0
        %340 = vmatpush1.msra.mxu0 %v327
        %341 = vmatprep.subr.mxu0 0.0
        %342 = vmatpush1.msra.mxu0 0.0
        %343 = vmatprep.subr.mxu0 0.0
        %344 = vmatpush1.msra.mxu0 0.0
        %345 = vmatprep.subr.mxu0 0.0
        %346 = vmatpush1.msra.mxu0 0.0
        %347 = vmatprep.subr.mxu0 0.0
        %348 = vmatpush1.msra.mxu0 0.0
        %349 = vmatprep.subr.mxu0 0.0
        %350 = vmatpush1.msra.mxu0 0.0
        %351 = vmatprep.subr.mxu0 0.0
        %352 = vmatpush1.msra.mxu0 0.0
        %353 = vmatprep.subr.mxu0 0.0
        %354 = vmatpush1.msra.mxu0 0.0
        %355 = vmatprep.subr.mxu0 0.0
        %356 = vmatpush1.msra.mxu0 0.0
        %357 = vmatprep.subr.mxu0 0.0
        %358 = vmatpush1.msra.mxu0 0.0
        %359 = vmatprep.subr.mxu0 0.0
        %360 = vmatpush1.msra.mxu0 0.0
        %361 = vmatprep.subr.mxu0 0.0
        %362 = vmatpush1.msra.mxu0 0.0
        %363 = vmatprep.subr.mxu0 0.0
        %364 = vmatpush1.msra.mxu0 0.0
        %365 = vmatprep.subr.mxu0 0.0
        %366 = vmatpush1.msra.mxu0 0.0
        %367 = vmatprep.subr.mxu0 0.0
        %368 = vmatpush1.msra.mxu0 0.0
        %369 = vmatprep.subr.mxu0 0.0
        %370 = vmatpush1.msra.mxu0 0.0
        %371 = vmatprep.subr.mxu0 0.0
        %372 = vmatpush1.msra.mxu0 0.0
        %373 = vmatprep.subr.mxu0 0.0
        %374 = vmatpush1.msra.mxu0 0.0
        %375 = vmatprep.subr.mxu0 0.0
        %376 = vmatpush1.msra.mxu0 0.0
        %377 = vmatprep.subr.mxu0 0.0
        %378 = vmatpush1.msra.mxu0 0.0
        %379 = vmatprep.subr.mxu0 0.0
        %380 = vmatpush1.msra.mxu0 0.0
        %381 = vmatprep.subr.mxu0 0.0
        %382 = vmatpush1.msra.mxu0 0.0
        %383 = vmatprep.subr.mxu0 0.0
        %384 = vmatpush1.msra.mxu0 0.0
        %385 = vmatprep.subr.mxu0 0.0
        %386 = vmatpush1.msra.mxu0 0.0
        %387 = vmatprep.subr.mxu0 0.0
        %388 = vmatpush1.msra.mxu0 0.0
        %389 = vmatprep.subr.mxu0 0.0
        %390 = vmatpush1.msra.mxu0 0.0
        %391 = vmatprep.subr.mxu0 0.0
        %392 = vmatpush1.msra.mxu0 0.0
        %393 = vmatprep.subr.mxu0 0.0
        %394 = vmatpush1.msra.mxu0 0.0
        %395 = vmatprep.subr.mxu0 0.0
        %396 = vmatpush1.msra.mxu0 0.0
        %397 = vmatprep.subr.mxu0 0.0
        %398 = vmatpush1.msra.mxu0 0.0
        %399 = vmatprep.subr.mxu0 0.0
        %400 = vmatpush1.msra.mxu0 0.0
        %401 = vmatprep.mubr.f32.mxu0 0.0
        %402 = vmatmul.mubr.f32.gmra.mrb[0].mxu0 %v332
        %v403 = vpop.f32.mrb[0].mxu0
        %v404 = vadd.f32 0.0, %v403
        %v405 = vpop.f32.mrb[0].mxu0
        %406 = vmatprep.mubr.f32.mxu0 0.0
        %407 = vmatmul.mubr.f32.gmra.mrb[0].mxu0 %v335
        %v408 = vpop.f32.mrb[0].mxu0
        %v409 = vadd.f32 0.0, %v408
        %v410 = vpop.f32.mrb[0].mxu0
        %411 = vdwg.mxu0
        %414 = vrot.lane.b32.xlu0 %v326, 6
        %v415 = vpop.permute.xlu0 %414
        %416 = vrot.lane.b32.xlu0 %v327, 6
        %v417 = vpop.permute.xlu0 %416
        %vm420 = vcmask 48128
        %v421 = vsel %vm420, %v404, %v415
        %v422 = vsel %vm420, %v409, %v417
        %v423 = vld [vmem:[%s2] sm:$0xff]
        %v424 = vld [vmem:[%s2 + $0x8] sm:$0xf]
        %v425 = vld [vmem:[%s3] sm:$0x1]
        %v427 = vlaneseq
        %v428 = vshrl.u32 %v427, 7
        %v429 = vsub.s32 0, %v428
        %v430 = vrot.slane %v425, %v429
        %vm432 = vcmask 97280
        %v434 = vsel %vm432, %v421, 0
        %v437 = vsel %vm432, %v422, 0
        %vm439 = vcmask 1043456
        %v441 = vsel %vm439, %v424, 0
        %443 = vmatprep.subr.mxu0 0.0
        %444 = vmatpush1.msra.mxu0 %v423
        %445 = vmatprep.subr.mxu0 0.0
        %446 = vmatpush1.msra.mxu0 %v441
        %447 = vmatprep.subr.mxu0 0.0
        %448 = vmatpush1.msra.mxu0 0.0
        %449 = vmatprep.subr.mxu0 0.0
        %450 = vmatpush1.msra.mxu0 0.0
        %451 = vmatprep.subr.mxu0 0.0
        %452 = vmatpush1.msra.mxu0 0.0
        %453 = vmatprep.subr.mxu0 0.0
        %454 = vmatpush1.msra.mxu0 0.0
        %455 = vmatprep.subr.mxu0 0.0
        %456 = vmatpush1.msra.mxu0 0.0
        %457 = vmatprep.subr.mxu0 0.0
        %458 = vmatpush1.msra.mxu0 0.0
        %459 = vmatprep.subr.mxu0 0.0
        %460 = vmatpush1.msra.mxu0 0.0
        %461 = vmatprep.subr.mxu0 0.0
        %462 = vmatpush1.msra.mxu0 0.0
        %463 = vmatprep.subr.mxu0 0.0
        %464 = vmatpush1.msra.mxu0 0.0
        %465 = vmatprep.subr.mxu0 0.0
        %466 = vmatpush1.msra.mxu0 0.0
        %467 = vmatprep.subr.mxu0 0.0
        %468 = vmatpush1.msra.mxu0 0.0
        %469 = vmatprep.subr.mxu0 0.0
        %470 = vmatpush1.msra.mxu0 0.0
        %471 = vmatprep.subr.mxu0 0.0
        %472 = vmatpush1.msra.mxu0 0.0
        %473 = vmatprep.subr.mxu0 0.0
        %474 = vmatpush1.msra.mxu0 0.0
        %475 = vmatprep.subr.mxu0 0.0
        %476 = vmatpush1.msra.mxu0 0.0
        %477 = vmatprep.subr.mxu0 0.0
        %478 = vmatpush1.msra.mxu0 0.0
        %479 = vmatprep.subr.mxu0 0.0
        %480 = vmatpush1.msra.mxu0 0.0
        %481 = vmatprep.subr.mxu0 0.0
        %482 = vmatpush1.msra.mxu0 0.0
        %483 = vmatprep.subr.mxu0 0.0
        %484 = vmatpush1.msra.mxu0 0.0
        %485 = vmatprep.subr.mxu0 0.0
        %486 = vmatpush1.msra.mxu0 0.0
        %487 = vmatprep.subr.mxu0 0.0
        %488 = vmatpush1.msra.mxu0 0.0
        %489 = vmatprep.subr.mxu0 0.0
        %490 = vmatpush1.msra.mxu0 0.0
        %491 = vmatprep.subr.mxu0 0.0
        %492 = vmatpush1.msra.mxu0 0.0
        %493 = vmatprep.subr.mxu0 0.0
        %494 = vmatpush1.msra.mxu0 0.0
        %495 = vmatprep.subr.mxu0 0.0
        %496 = vmatpush1.msra.mxu0 0.0
        %497 = vmatprep.subr.mxu0 0.0
        %498 = vmatpush1.msra.mxu0 0.0
        %499 = vmatprep.subr.mxu0 0.0
        %500 = vmatpush1.msra.mxu0 0.0
        %501 = vmatprep.subr.mxu0 0.0
        %502 = vmatpush1.msra.mxu0 0.0
        %503 = vmatprep.subr.mxu0 0.0
        %504 = vmatpush1.msra.mxu0 0.0
        %505 = vmatprep.subr.mxu0 0.0
        %506 = vmatpush1.msra.mxu0 0.0
        %507 = vmatprep.mubr.f32.mxu0 0.0
        %508 = vmatmul.mubr.f32.gmra.mrb[0].mxu0 %v434
        %v509 = vpop.f32.mrb[0].mxu0
        %v510 = vadd.f32 %v430, %v509
        %v511 = vpop.f32.mrb[0].mxu0
        %512 = vmatprep.mubr.f32.mxu0 0.0
        %513 = vmatmul.mubr.f32.gmra.mrb[0].mxu0 %v437
        %v514 = vpop.f32.mrb[0].mxu0
        %v515 = vadd.f32 %v430, %v514
        %v516 = vpop.f32.mrb[0].mxu0
        %517 = vdwg.mxu0
        %v518 = vmax.f32 %v510, 0.0
        %v519 = vmax.f32 %v515, 0.0
        %520 = vmatprep.subr.mxu0 0.0
        %521 = vmatpush1.msra.mxu0 %v518
        %522 = vmatprep.subr.mxu0 0.0
        %523 = vmatpush1.msra.mxu0 %v519
        %524 = vmatprep.subr.mxu0 0.0
        %525 = vmatpush1.msra.mxu0 0.0
        %526 = vmatprep.subr.mxu0 0.0
        %527 = vmatpush1.msra.mxu0 0.0
        %528 = vmatprep.subr.mxu0 0.0
        %529 = vmatpush1.msra.mxu0 0.0
        %530 = vmatprep.subr.mxu0 0.0
        %531 = vmatpush1.msra.mxu0 0.0
        %532 = vmatprep.subr.mxu0 0.0
        %533 = vmatpush1.msra.mxu0 0.0
        %534 = vmatprep.subr.mxu0 0.0
        %535 = vmatpush1.msra.mxu0 0.0
        %536 = vmatprep.subr.mxu0 0.0
        %537 = vmatpush1.msra.mxu0 0.0
        %538 = vmatprep.subr.mxu0 0.0
        %539 = vmatpush1.msra.mxu0 0.0
        %540 = vmatprep.subr.mxu0 0.0
        %541 = vmatpush1.msra.mxu0 0.0
        %542 = vmatprep.subr.mxu0 0.0
        %543 = vmatpush1.msra.mxu0 0.0
        %544 = vmatprep.subr.mxu0 0.0
        %545 = vmatpush1.msra.mxu0 0.0
        %546 = vmatprep.subr.mxu0 0.0
        %547 = vmatpush1.msra.mxu0 0.0
        %548 = vmatprep.subr.mxu0 0.0
        %549 = vmatpush1.msra.mxu0 0.0
        %550 = vmatprep.subr.mxu0 0.0
        %551 = vmatpush1.msra.mxu0 0.0
        %552 = vmatprep.subr.mxu0 0.0
        %553 = vmatpush1.msra.mxu0 0.0
        %554 = vmatprep.subr.mxu0 0.0
        %555 = vmatpush1.msra.mxu0 0.0
        %556 = vmatprep.subr.mxu0 0.0
        %557 = vmatpush1.msra.mxu0 0.0
        %558 = vmatprep.subr.mxu0 0.0
        %559 = vmatpush1.msra.mxu0 0.0
        %560 = vmatprep.subr.mxu0 0.0
        %561 = vmatpush1.msra.mxu0 0.0
        %562 = vmatprep.subr.mxu0 0.0
        %563 = vmatpush1.msra.mxu0 0.0
        %564 = vmatprep.subr.mxu0 0.0
        %565 = vmatpush1.msra.mxu0 0.0
        %566 = vmatprep.subr.mxu0 0.0
        %567 = vmatpush1.msra.mxu0 0.0
        %568 = vmatprep.subr.mxu0 0.0
        %569 = vmatpush1.msra.mxu0 0.0
        %570 = vmatprep.subr.mxu0 0.0
        %571 = vmatpush1.msra.mxu0 0.0
        %572 = vmatprep.subr.mxu0 0.0
        %573 = vmatpush1.msra.mxu0 0.0
        %574 = vmatprep.subr.mxu0 0.0
        %575 = vmatpush1.msra.mxu0 0.0
        %576 = vmatprep.subr.mxu0 0.0
        %577 = vmatpush1.msra.mxu0 0.0
        %578 = vmatprep.subr.mxu0 0.0
        %579 = vmatpush1.msra.mxu0 0.0
        %580 = vmatprep.subr.mxu0 0.0
        %581 = vmatpush1.msra.mxu0 0.0
        %582 = vmatprep.subr.mxu0 0.0
        %583 = vmatpush1.msra.mxu0 0.0
        %584 = vmatprep.mubr.f32.mxu0 0.0
        %585 = vmatmul.mubr.f32.gmra.mrb[0].mxu0 %v332
        %v586 = vpop.f32.mrb[0].mxu0
        %v587 = vadd.f32 0.0, %v586
        %v588 = vpop.f32.mrb[0].mxu0
        %589 = vmatprep.mubr.f32.mxu0 0.0
        %590 = vmatmul.mubr.f32.gmra.mrb[0].mxu0 %v335
        %v591 = vpop.f32.mrb[0].mxu0
        %v592 = vadd.f32 0.0, %v591
        %v593 = vpop.f32.mrb[0].mxu0
        %594 = vdwg.mxu0
        %597 = vrot.lane.b32.xlu0 %v518, 64
        %v598 = vpop.permute.xlu0 %597
        %599 = vrot.lane.b32.xlu0 %v519, 64
        %v600 = vpop.permute.xlu0 %599
        %vm603 = vcmask 523264
        %v604 = vsel %vm603, %v587, %v598
        %v605 = vsel %vm603, %v592, %v600
        %v606 = vld [vmem:[%s4] sm:$0xff]
        %v607 = vld [vmem:[%s4 + $0x8] sm:$0xff]
        %v608 = vld [vmem:[%s4 + $0x10] sm:$0xff]
        %v609 = vld [vmem:[%s4 + $0x18] sm:$0xff]
        %v610 = vld [vmem:[%s4 + $0x20] sm:$0xff]
        %v611 = vld [vmem:[%s4 + $0x28] sm:$0xff]
        %v612 = vld [vmem:[%s4 + $0x30] sm:$0xff]
        %v613 = vld [vmem:[%s4 + $0x38] sm:$0xff]
        %v614 = vld [vmem:[%s4 + $0x40] sm:$0xff]
        %v615 = vld [vmem:[%s4 + $0x48] sm:$0xff]
        %v616 = vld [vmem:[%s4 + $0x50] sm:$0xff]
        %v617 = vld [vmem:[%s4 + $0x58] sm:$0xff]
        %v618 = vld [vmem:[%s4 + $0x60] sm:$0xff]
        %v619 = vld [vmem:[%s4 + $0x68] sm:$0xff]
        %v620 = vld [vmem:[%s4 + $0x70] sm:$0xff]
        %v621 = vld [vmem:[%s4 + $0x78] sm:$0xff]
        %v622 = vld [vmem:[%s5] sm:$0x1]
        %v624 = vlaneseq
        %v625 = vshrl.u32 %v624, 7
        %v626 = vsub.s32 0, %v625
        %v627 = vrot.slane %v622, %v626
        %629 = vmatprep.subr.mxu0 0.0
        %630 = vmatpush1.msra.mxu0 %v606
        %631 = vmatprep.subr.mxu0 0.0
        %632 = vmatpush1.msra.mxu0 %v607
        %633 = vmatprep.subr.mxu0 0.0
        %634 = vmatpush1.msra.mxu0 %v608
        %635 = vmatprep.subr.mxu0 0.0
        %636 = vmatpush1.msra.mxu0 %v609
        %637 = vmatprep.subr.mxu0 0.0
        %638 = vmatpush1.msra.mxu0 %v610
        %639 = vmatprep.subr.mxu0 0.0
        %640 = vmatpush1.msra.mxu0 %v611
        %641 = vmatprep.subr.mxu0 0.0
        %642 = vmatpush1.msra.mxu0 %v612
        %643 = vmatprep.subr.mxu0 0.0
        %644 = vmatpush1.msra.mxu0 %v613
        %645 = vmatprep.subr.mxu0 0.0
        %646 = vmatpush1.msra.mxu0 %v614
        %647 = vmatprep.subr.mxu0 0.0
        %648 = vmatpush1.msra.mxu0 %v615
        %649 = vmatprep.subr.mxu0 0.0
        %650 = vmatpush1.msra.mxu0 %v616
        %651 = vmatprep.subr.mxu0 0.0
        %652 = vmatpush1.msra.mxu0 %v617
        %653 = vmatprep.subr.mxu0 0.0
        %654 = vmatpush1.msra.mxu0 %v618
        %655 = vmatprep.subr.mxu0 0.0
        %656 = vmatpush1.msra.mxu0 %v619
        %657 = vmatprep.subr.mxu0 0.0
        %658 = vmatpush1.msra.mxu0 %v620
        %659 = vmatprep.subr.mxu0 0.0
        %660 = vmatpush1.msra.mxu0 %v621
        %661 = vmatprep.subr.mxu0 0.0
        %662 = vmatpush1.msra.mxu0 0.0
        %663 = vmatprep.subr.mxu0 0.0
        %664 = vmatpush1.msra.mxu0 0.0
        %665 = vmatprep.subr.mxu0 0.0
        %666 = vmatpush1.msra.mxu0 0.0
        %667 = vmatprep.subr.mxu0 0.0
        %668 = vmatpush1.msra.mxu0 0.0
        %669 = vmatprep.subr.mxu0 0.0
        %670 = vmatpush1.msra.mxu0 0.0
        %671 = vmatprep.subr.mxu0 0.0
        %672 = vmatpush1.msra.mxu0 0.0
        %673 = vmatprep.subr.mxu0 0.0
        %674 = vmatpush1.msra.mxu0 0.0
        %675 = vmatprep.subr.mxu0 0.0
        %676 = vmatpush1.msra.mxu0 0.0
        %677 = vmatprep.subr.mxu0 0.0
        %678 = vmatpush1.msra.mxu0 0.0
        %679 = vmatprep.subr.mxu0 0.0
        %680 = vmatpush1.msra.mxu0 0.0
        %681 = vmatprep.subr.mxu0 0.0
        %682 = vmatpush1.msra.mxu0 0.0
        %683 = vmatprep.subr.mxu0 0.0
        %684 = vmatpush1.msra.mxu0 0.0
        %685 = vmatprep.subr.mxu0 0.0
        %686 = vmatpush1.msra.mxu0 0.0
        %687 = vmatprep.subr.mxu0 0.0
        %688 = vmatpush1.msra.mxu0 0.0
        %689 = vmatprep.subr.mxu0 0.0
        %690 = vmatpush1.msra.mxu0 0.0
        %691 = vmatprep.subr.mxu0 0.0
        %692 = vmatpush1.msra.mxu0 0.0
        %693 = vmatprep.mubr.f32.mxu0 0.0
        %694 = vmatmul.mubr.f32.gmra.mrb[0].mxu0 %v604
        %v695 = vpop.f32.mrb[0].mxu0
        %v696 = vadd.f32 %v627, %v695
        %v697 = vpop.f32.mrb[0].mxu0
        %698 = vmatprep.mubr.f32.mxu0 0.0
        %699 = vmatmul.mubr.f32.gmra.mrb[0].mxu0 %v605
        %v700 = vpop.f32.mrb[0].mxu0
        %v701 = vadd.f32 %v627, %v700
        %v702 = vpop.f32.mrb[0].mxu0
        %703 = vdwg.mxu0
        %v704 = vmax.f32 %v696, 0.0
        %v705 = vmax.f32 %v701, 0.0
        %v706 = vsel %vm603, %v704, 0.0
        %v707 = vsel %vm603, %v705, 0.0
        %v708 = vadd.f32 %v706, %v707
        %v709 = vrot.slane %v708, 4
        %v710 = vadd.f32 %v708, %v709
        %v711 = vrot.slane %v710, 2
        %v712 = vadd.f32 %v710, %v711
        %v713 = vrot.slane %v712, 1
        %v714 = vadd.f32 %v712, %v713
        %v715 = vrcp.pop 16.0
        %v716 = vmul.f32 %v714, %v715
        %v717 = vld [vmem:[%s6] sm:$0xff]
        %v718 = vld [vmem:[%s6 + $0x8] sm:$0xff]
        %v719 = vld [vmem:[%s6 + $0x10] sm:$0xff]
        %v720 = vld [vmem:[%s6 + $0x18] sm:$0xff]
        %v721 = vld [vmem:[%s6 + $0x20] sm:$0xff]
        %v722 = vld [vmem:[%s6 + $0x28] sm:$0xff]
        %v723 = vld [vmem:[%s6 + $0x30] sm:$0xff]
        %v724 = vld [vmem:[%s6 + $0x38] sm:$0xff]
        %v725 = vld [vmem:[%s7] sm:$0x1]
        %v727 = vsel %vm603, %v716, 0
        %729 = vmatprep.subr.mxu0 0.0
        %730 = vmatpush1.msra.mxu0 %v717
        %731 = vmatprep.subr.mxu0 0.0
        %732 = vmatpush1.msra.mxu0 %v718
        %733 = vmatprep.subr.mxu0 0.0
        %734 = vmatpush1.msra.mxu0 %v719
        %735 = vmatprep.subr.mxu0 0.0
        %736 = vmatpush1.msra.mxu0 %v720
        %737 = vmatprep.subr.mxu0 0.0
        %738 = vmatpush1.msra.mxu0 %v721
        %739 = vmatprep.subr.mxu0 0.0
        %740 = vmatpush1.msra.mxu0 %v722
        %741 = vmatprep.subr.mxu0 0.0
        %742 = vmatpush1.msra.mxu0 %v723
        %743 = vmatprep.subr.mxu0 0.0
        %744 = vmatpush1.msra.mxu0 %v724
        %745 = vmatprep.subr.mxu0 0.0
        %746 = vmatpush1.msra.mxu0 0.0
        %747 = vmatprep.subr.mxu0 0.0
        %748 = vmatpush1.msra.mxu0 0.0
        %749 = vmatprep.subr.mxu0 0.0
        %750 = vmatpush1.msra.mxu0 0.0
        %751 = vmatprep.subr.mxu0 0.0
        %752 = vmatpush1.msra.mxu0 0.0
        %753 = vmatprep.subr.mxu0 0.0
        %754 = vmatpush1.msra.mxu0 0.0
        %755 = vmatprep.subr.mxu0 0.0
        %756 = vmatpush1.msra.mxu0 0.0
        %757 = vmatprep.subr.mxu0 0.0
        %758 = vmatpush1.msra.mxu0 0.0
        %759 = vmatprep.subr.mxu0 0.0
        %760 = vmatpush1.msra.mxu0 0.0
        %761 = vmatprep.subr.mxu0 0.0
        %762 = vmatpush1.msra.mxu0 0.0
        %763 = vmatprep.subr.mxu0 0.0
        %764 = vmatpush1.msra.mxu0 0.0
        %765 = vmatprep.subr.mxu0 0.0
        %766 = vmatpush1.msra.mxu0 0.0
        %767 = vmatprep.subr.mxu0 0.0
        %768 = vmatpush1.msra.mxu0 0.0
        %769 = vmatprep.subr.mxu0 0.0
        %770 = vmatpush1.msra.mxu0 0.0
        %771 = vmatprep.subr.mxu0 0.0
        %772 = vmatpush1.msra.mxu0 0.0
        %773 = vmatprep.subr.mxu0 0.0
        %774 = vmatpush1.msra.mxu0 0.0
        %775 = vmatprep.subr.mxu0 0.0
        %776 = vmatpush1.msra.mxu0 0.0
        %777 = vmatprep.subr.mxu0 0.0
        %778 = vmatpush1.msra.mxu0 0.0
        %779 = vmatprep.subr.mxu0 0.0
        %780 = vmatpush1.msra.mxu0 0.0
        %781 = vmatprep.subr.mxu0 0.0
        %782 = vmatpush1.msra.mxu0 0.0
        %783 = vmatprep.subr.mxu0 0.0
        %784 = vmatpush1.msra.mxu0 0.0
        %785 = vmatprep.subr.mxu0 0.0
        %786 = vmatpush1.msra.mxu0 0.0
        %787 = vmatprep.subr.mxu0 0.0
        %788 = vmatpush1.msra.mxu0 0.0
        %789 = vmatprep.subr.mxu0 0.0
        %790 = vmatpush1.msra.mxu0 0.0
        %791 = vmatprep.subr.mxu0 0.0
        %792 = vmatpush1.msra.mxu0 0.0
        %793 = vmatprep.mubr.f32.mxu0 0.0
        %794 = vmatmul.mubr.f32.gmra.mrb[0].mxu0 %v727
        %v795 = vpop.f32.mrb[0].mxu0
        %v796 = vadd.f32 %v725, %v795
        %v797 = vpop.f32.mrb[0].mxu0
        %798 = vdwg.mxu0
        %v799 = vlaneseq
        %v800 = vshrl.u32 %v799, 7
        %v801 = vsub.s32 0, %v800
        %v802 = vrot.slane %v796, %v801
        %803 = vst [vmem:[%s314] sm:$0xff] %v802
        %s804 = sand.u32 %s208, 1
        %s805 = scalar_lea.sflag [#allocation3], %s804
        %s806 = sand.u32 %s208, 1
        %s807 = smul.addr %s806, 8
        %s808 = scalar_lea.vmem [#allocation2], %s807
        // Predicated region
        $region53: #{tpu_custom_call.1} parent=51 // pred_check
          %p809 = pneg %p218
        $region54: #{tpu_custom_call.1} parent=51 // pred_check_branch
          %811 = sbr.rel (%p809) target = $region56
        $region55: #{tpu_custom_call.1} parent=51 // pred_region
          %s813 = ssub.s32 128, 128
          %814 = vsyncadd %s805, %s813
          %s815 = smul.addr %s22, 128
          %s816 = scalar_lea.hbm %s8, %s815
          %s818 = sshll.u32 %s808, 4
          %s819 = int_to_ptr.vmem [resolvable:$true] %s818
          %821 = dma.vmem_to_hbm [thread:$0]  %s819, 128, %s816, %s805
        $region56: #{tpu_custom_call.1} parent=51 // pred_fallthru
          _
      $region52: #{tpu_custom_call.1} parent=5 // pred_fallthru
        _
      %p822 = scmp.le.s32.totalorder 2, %s17
      // Predicated region
      $region57: #{tpu_custom_call.1} parent=5 // pred_check
        %p823 = pneg %p822
      $region58: #{tpu_custom_call.1} parent=5 // pred_check_branch
        %825 = sbr.rel (%p823) target = $region60
      $region59: #{tpu_custom_call.1} parent=5 // pred_region
        %s826 = ssub.s32 %s17, 2
        // Predicated region
        $region61: #{tpu_custom_call.1} parent=59 // pred_check
          %p827 = pneg %p224
        $region62: #{tpu_custom_call.1} parent=59 // pred_check_branch
          %829 = sbr.rel (%p827) target = $region64
        $region63: #{tpu_custom_call.1} parent=59 // pred_region
          %s830 = sand.u32 %s209, 1
          %s831 = scalar_lea.sflag [#allocation3], %s830
          %s832 = sand.u32 %s209, 1
          %s833 = smul.addr %s832, 8
          %s834 = scalar_lea.vmem [#allocation2], %s833
          %835 = dma.done %s831, 128
        $region64: #{tpu_custom_call.1} parent=59 // pred_fallthru
          _
      $region60: #{tpu_custom_call.1} parent=5 // pred_fallthru
        _
    $region6: #{tpu_custom_call.1} parent=1 // loop_footer
      %s21 = sadd.s32 1, %s17
    $region7: #{tpu_custom_call.1} parent=1 // loop_footer_branch
      %16 = sbr.rel target = $region3
    $region8: #{tpu_custom_call.1} parent=1 // loop_exit
      _
    %836 = vsyncpa [#allocation3], 1
    %s837 = scalar_lea.sflag [#allocation3], 1
    %838 = vsyncpa %s837, 1

</llo_original>
